<compile_context>
chip_gen: v5e
topology: v5e:2x2
jax: 0.10.0
libtpu: 0.0.40
codegen_flags: <defaults>
</compile_context>

<pallas_src>
import jax
import jax.numpy as jnp
from jax.experimental import pallas as pl
from jax.experimental.pallas import tpu as pltpu


def _round_up(x, m):
    return (x + m - 1) // m * m


def _transpose_kernel(x_ref, o_ref):
    # Swap the last two axes of the current tile (works for 2-D or 3-D views).
    o_ref[...] = jnp.swapaxes(x_ref[...], -1, -2)


_SMALL_SLAB_BYTES = 256 * 1024    # below this per-slab size, batch slabs per step
_SMALL_TARGET_BYTES = 512 * 1024  # target per-buffer size in batched-slab mode
_MAX_TILE = 512                   # lane-dense tile cap; fine for v5e/v6e/v7x


def _pick_tile(padded_dim):
    # padded_dim is a multiple of 128; take the largest of {512, 256, 128}
    # that divides it exactly so no padding beyond 128-alignment is needed.
    for t in (_MAX_TILE, 256, 128):
        if padded_dim % t == 0:
            return t
    return 128


def _transpose_batched(x3, B, M, N):
    """Small-slab path: move TB whole (M, N) slabs per grid step."""
    dtype = x3.dtype
    itemsize = jnp.dtype(dtype).itemsize
    slab_bytes = max(1, M * N * itemsize)
    TB = max(1, min(B, _SMALL_TARGET_BYTES // slab_bytes))
    Bp = _round_up(B, TB)
    if Bp != B:
        x3 = jnp.pad(x3, ((0, Bp - B), (0, 0), (0, 0)))

    out3 = pl.pallas_call(
        _transpose_kernel,
        out_shape=jax.ShapeDtypeStruct((Bp, N, M), dtype),
        grid_spec=pltpu.PrefetchScalarGridSpec(
            num_scalar_prefetch=0,
            grid=(Bp // TB,),
            in_specs=[pl.BlockSpec((TB, M, N), lambda b: (b, 0, 0))],
            out_specs=pl.BlockSpec((TB, N, M), lambda b: (b, 0, 0)),
        ),
        compiler_params=pltpu.CompilerParams(
            dimension_semantics=("parallel",),
            vmem_limit_bytes=32 << 20,
        ),
        cost_estimate=pl.CostEstimate(
            flops=0, transcendentals=0,
            bytes_accessed=2 * Bp * M * N * itemsize),
    )(x3)

    if Bp != B:
        out3 = out3[:B]
    return out3


def _transpose_tiled(x3, B, M, N):
    """Large-slab path: tile the (M, N) matrix with lane-dense tiles."""
    dtype = x3.dtype
    itemsize = jnp.dtype(dtype).itemsize
    Mp = _round_up(M, 128)
    Np = _round_up(N, 128)
    if (Mp, Np) != (M, N):
        x3 = jnp.pad(x3, ((0, 0), (0, Mp - M), (0, Np - N)))
    TM = _pick_tile(Mp)
    TN = _pick_tile(Np)

    out3 = pl.pallas_call(
        _transpose_kernel,
        out_shape=jax.ShapeDtypeStruct((B, Np, Mp), dtype),
        grid_spec=pltpu.PrefetchScalarGridSpec(
            num_scalar_prefetch=0,
            grid=(B, Mp // TM, Np // TN),
            in_specs=[pl.BlockSpec((pl.Squeezed(), TM, TN),
                                   lambda b, i, j: (b, i, j))],
            out_specs=pl.BlockSpec((pl.Squeezed(), TN, TM),
                                   lambda b, i, j: (b, j, i)),
        ),
        compiler_params=pltpu.CompilerParams(
            dimension_semantics=("parallel", "parallel", "parallel"),
            vmem_limit_bytes=32 << 20,
        ),
        cost_estimate=pl.CostEstimate(
            flops=0, transcendentals=0,
            bytes_accessed=2 * B * Mp * Np * itemsize),
    )(x3)

    if (Mp, Np) != (M, N):
        out3 = out3[:, :N, :M]
    return out3


def transpose_layer(x):
    """JAX/Pallas equivalent of TransposeLayer().forward(x) == x.mT."""
    if x.ndim < 2:
        raise ValueError("TransposeLayer requires at least 2 dims")
    *lead, M, N = x.shape
    B = 1
    for d in lead:
        B *= d
    x3 = x.reshape(B, M, N)

    itemsize = jnp.dtype(x.dtype).itemsize
    if M * N * itemsize <= _SMALL_SLAB_BYTES:
        out3 = _transpose_batched(x3, B, M, N)
    else:
        out3 = _transpose_tiled(x3, B, M, N)

    return out3.reshape(*lead, N, M)


if __name__ == "__main__":
    key = jax.random.PRNGKey(0)

    # 1) Small-slab / many-batch path (matches the module's typical usage).
    x_small = jax.random.normal(key, (2, 4, 16, 32), dtype=jnp.float32)
    y_small = transpose_layer(x_small)
    jax.block_until_ready(y_small)
    y_small_ref = jnp.swapaxes(x_small, -1, -2)
    assert y_small.shape == y_small_ref.shape, (y_small.shape, y_small_ref.shape)
    assert jnp.array_equal(y_small, y_small_ref), "mismatch (batched path)"

    # 2) Tiled path with ragged (non-128-multiple) dims to exercise padding
    #    and the swapped output index_map.
    x_big = jax.random.normal(key, (2, 300, 260), dtype=jnp.float32)
    y_big = transpose_layer(x_big)
    jax.block_until_ready(y_big)
    y_big_ref = jnp.swapaxes(x_big, -1, -2)
    assert y_big.shape == y_big_ref.shape, (y_big.shape, y_big_ref.shape)
    assert jnp.array_equal(y_big, y_big_ref), "mismatch (tiled path)"

    print("KERNEL_OK")
</pallas_src>

<mosaic_0001>
module attributes {stable_mosaic.version = 11 : i64} {
  func.func @_transpose_kernel(%arg0: i32, %arg1: memref<8x16x32xf32, #tpu.memory_space<vmem>>, %arg2: memref<8x32x16xf32, #tpu.memory_space<vmem>>) attributes {dimension_semantics = [#tpu.dimension_semantics<parallel>], iteration_bounds = array<i64: 1>, scalar_prefetch = 0 : i64, scratch_operands = 0 : i64, tpu.core_type = #tpu.core_type<tc>, window_params = [{transform_indices = @transform_0, window_bounds = array<i64: 8, 16, 32>}, {transform_indices = @transform_1, window_bounds = array<i64: 8, 32, 16>}]} {
    %c0 = arith.constant 0 : index
    %c0_0 = arith.constant 0 : index
    %c0_1 = arith.constant 0 : index
    %0 = vector.load %arg1[%c0, %c0_0, %c0_1] : memref<8x16x32xf32, #tpu.memory_space<vmem>>, vector<8x16x32xf32>
    %1 = tpu.transpose %0, [0, 2, 1] : vector<8x16x32xf32> -> vector<8x32x16xf32>
    %c0_2 = arith.constant 0 : index
    %c0_3 = arith.constant 0 : index
    %c0_4 = arith.constant 0 : index
    %2 = vector.load %arg2[%c0_2, %c0_3, %c0_4] : memref<8x32x16xf32, #tpu.memory_space<vmem>>, vector<8x32x16xf32>
    tpu.vector_store %arg2[%c0_2, %c0_3, %c0_4], %1 {strides = array<i32>} : memref<8x32x16xf32, #tpu.memory_space<vmem>>, vector<8x32x16xf32>,
    return
  }
  func.func @transform_0(%arg0: i32) -> (i32, i32, i32) {
    %c0_i32 = arith.constant 0 : i32
    %c0_i32_0 = arith.constant 0 : i32
    %c0_i32_1 = arith.constant 0 : i32
    return %arg0, %c0_i32, %c0_i32_0 : i32, i32, i32
  }
  func.func @transform_1(%arg0: i32) -> (i32, i32, i32) {
    %c0_i32 = arith.constant 0 : i32
    %c0_i32_0 = arith.constant 0 : i32
    %c0_i32_1 = arith.constant 0 : i32
    return %arg0, %c0_i32, %c0_i32_0 : i32, i32, i32
  }
}

</mosaic_0001>

<llo_original>
// kernel: tpu_custom_call.1
$region0: #{tpu_custom_call.1}
  #allocation0 [shape = 'u32[]', space=smem, size = 0x4, offset = 0x4, fixed_abs, tag = 'smem constant byte address 0x4 - core index']
  #allocation1 [shape = 'u32[72,128]{1,0:T(1,128)}', space=vmem, size = 0x9000, scoped, tag = 'internal scratch']
  %s0 = inlined_call_operand.hbm [shape: f32[8,16,32], index: 0, kind: input, shape index: {}]
  %s1 = inlined_call_operand.vmem [shape: f32[8,32,16], index: 1, kind: output, shape index: {}]
  %s2 = sld [smem:[#allocation0]]
  $region18: #{tpu_custom_call.1} parent=0
    _
  %s4 = ssub.s32 1, %s2
  %s5 = scalar_select 0, %s4, %s2
  $region1: #{tpu_custom_call.1} parent=0
    #allocation2 [shape = 'u8[65536]{0}', space=vmem, size = 0x10000, scoped, tag = 'input window, operand 0, single buffered']
    #allocation3 [shape = 's32[1]{0}', space=sflag, size = 0x4, scoped, tag = 'scoped memory for tpu_custom_call.1']
    %6 = vsyncpa [#allocation3], 0
    // Predicated region
    $region2: #{tpu_custom_call.1} parent=1 // pred_check
      _
    $region3: #{tpu_custom_call.1} parent=1 // pred_check_branch
      %8 = sbr.rel (0) target = $region5
    $region4: #{tpu_custom_call.1} parent=1 // pred_region
      %10 = vsyncadd [#allocation3], 0
      %s11 = sshll.u32 %s0, 4
      %s12 = int_to_ptr.hbm [resolvable:$true] %s11
      %s13 = sshll.u32 [#allocation2], 4
      %s14 = int_to_ptr.vmem [resolvable:$true] %s13
      %19 = dma.hbm_to_vmem [thread:$0]  %s12, 2048, %s14, [#allocation3], 128, 128, 8
    $region5: #{tpu_custom_call.1} parent=1 // pred_fallthru
      _
    // Predicated region
    $region6: #{tpu_custom_call.1} parent=1 // pred_check
      _
    $region7: #{tpu_custom_call.1} parent=1 // pred_check_branch
      %21 = sbr.rel (0) target = $region9
    $region8: #{tpu_custom_call.1} parent=1 // pred_region
      %23 = dma.done [#allocation3], 2048
    $region9: #{tpu_custom_call.1} parent=1 // pred_fallthru
      _
    %v24 = vld [vmem:[#allocation2] sm:$0xff]
    %v25 = vld [vmem:[#allocation2 + $0x8] sm:$0xff]
    %v26 = vld [vmem:[#allocation2 + $0x10] sm:$0xff]
    %v27 = vld [vmem:[#allocation2 + $0x18] sm:$0xff]
    %v28 = vld [vmem:[#allocation2 + $0x20] sm:$0xff]
    %v29 = vld [vmem:[#allocation2 + $0x28] sm:$0xff]
    %v30 = vld [vmem:[#allocation2 + $0x30] sm:$0xff]
    %v31 = vld [vmem:[#allocation2 + $0x38] sm:$0xff]
    %v32 = vld [vmem:[#allocation2 + $0x40] sm:$0xff]
    %v33 = vld [vmem:[#allocation2 + $0x48] sm:$0xff]
    %v34 = vld [vmem:[#allocation2 + $0x50] sm:$0xff]
    %v35 = vld [vmem:[#allocation2 + $0x58] sm:$0xff]
    %v36 = vld [vmem:[#allocation2 + $0x60] sm:$0xff]
    %v37 = vld [vmem:[#allocation2 + $0x68] sm:$0xff]
    %v38 = vld [vmem:[#allocation2 + $0x70] sm:$0xff]
    %v39 = vld [vmem:[#allocation2 + $0x78] sm:$0xff]
    %40 = vxpose.xlu0.b32.start [1/16] %v24, 128
    %41 = vxpose.xlu0.b32.cont [2/16] %v25, 128
    %42 = vxpose.xlu0.b32.cont [3/16] 0.0, 128
    %43 = vxpose.xlu0.b32.cont [4/16] 0.0, 128
    %44 = vxpose.xlu0.b32.cont [5/16] 0.0, 128
    %45 = vxpose.xlu0.b32.cont [6/16] 0.0, 128
    %46 = vxpose.xlu0.b32.cont [7/16] 0.0, 128
    %47 = vxpose.xlu0.b32.cont [8/16] 0.0, 128
    %48 = vxpose.xlu0.b32.cont [9/16] 0.0, 128
    %49 = vxpose.xlu0.b32.cont [10/16] 0.0, 128
    %50 = vxpose.xlu0.b32.cont [11/16] 0.0, 128
    %51 = vxpose.xlu0.b32.cont [12/16] 0.0, 128
    %52 = vxpose.xlu0.b32.cont [13/16] 0.0, 128
    %53 = vxpose.xlu0.b32.cont [14/16] 0.0, 128
    %54 = vxpose.xlu0.b32.cont [15/16] 0.0, 128
    %55 = vxpose.xlu0.b32.end [16/16] 0.0, 128
    %v56 = vpop.trf.xlu0
    %v57 = vpop.trf.xlu0
    %v58 = vpop.trf.xlu0
    %v59 = vpop.trf.xlu0
    %v60 = vpop.trf.xlu0
    %v61 = vpop.trf.xlu0
    %v62 = vpop.trf.xlu0
    %v63 = vpop.trf.xlu0
    %v64 = vpop.trf.xlu0
    %v65 = vpop.trf.xlu0
    %v66 = vpop.trf.xlu0
    %v67 = vpop.trf.xlu0
    %v68 = vpop.trf.xlu0
    %v69 = vpop.trf.xlu0
    %v70 = vpop.trf.xlu0
    %v71 = vpop.trf.xlu0
    %72 = vxpose.xlu0.b32.start [1/16] %v26, 128
    %73 = vxpose.xlu0.b32.cont [2/16] %v27, 128
    %74 = vxpose.xlu0.b32.cont [3/16] 0.0, 128
    %75 = vxpose.xlu0.b32.cont [4/16] 0.0, 128
    %76 = vxpose.xlu0.b32.cont [5/16] 0.0, 128
    %77 = vxpose.xlu0.b32.cont [6/16] 0.0, 128
    %78 = vxpose.xlu0.b32.cont [7/16] 0.0, 128
    %79 = vxpose.xlu0.b32.cont [8/16] 0.0, 128
    %80 = vxpose.xlu0.b32.cont [9/16] 0.0, 128
    %81 = vxpose.xlu0.b32.cont [10/16] 0.0, 128
    %82 = vxpose.xlu0.b32.cont [11/16] 0.0, 128
    %83 = vxpose.xlu0.b32.cont [12/16] 0.0, 128
    %84 = vxpose.xlu0.b32.cont [13/16] 0.0, 128
    %85 = vxpose.xlu0.b32.cont [14/16] 0.0, 128
    %86 = vxpose.xlu0.b32.cont [15/16] 0.0, 128
    %87 = vxpose.xlu0.b32.end [16/16] 0.0, 128
    %v88 = vpop.trf.xlu0
    %v89 = vpop.trf.xlu0
    %v90 = vpop.trf.xlu0
    %v91 = vpop.trf.xlu0
    %v92 = vpop.trf.xlu0
    %v93 = vpop.trf.xlu0
    %v94 = vpop.trf.xlu0
    %v95 = vpop.trf.xlu0
    %v96 = vpop.trf.xlu0
    %v97 = vpop.trf.xlu0
    %v98 = vpop.trf.xlu0
    %v99 = vpop.trf.xlu0
    %v100 = vpop.trf.xlu0
    %v101 = vpop.trf.xlu0
    %v102 = vpop.trf.xlu0
    %v103 = vpop.trf.xlu0
    %104 = vxpose.xlu0.b32.start [1/16] %v28, 128
    %105 = vxpose.xlu0.b32.cont [2/16] %v29, 128
    %106 = vxpose.xlu0.b32.cont [3/16] 0.0, 128
    %107 = vxpose.xlu0.b32.cont [4/16] 0.0, 128
    %108 = vxpose.xlu0.b32.cont [5/16] 0.0, 128
    %109 = vxpose.xlu0.b32.cont [6/16] 0.0, 128
    %110 = vxpose.xlu0.b32.cont [7/16] 0.0, 128
    %111 = vxpose.xlu0.b32.cont [8/16] 0.0, 128
    %112 = vxpose.xlu0.b32.cont [9/16] 0.0, 128
    %113 = vxpose.xlu0.b32.cont [10/16] 0.0, 128
    %114 = vxpose.xlu0.b32.cont [11/16] 0.0, 128
    %115 = vxpose.xlu0.b32.cont [12/16] 0.0, 128
    %116 = vxpose.xlu0.b32.cont [13/16] 0.0, 128
    %117 = vxpose.xlu0.b32.cont [14/16] 0.0, 128
    %118 = vxpose.xlu0.b32.cont [15/16] 0.0, 128
    %119 = vxpose.xlu0.b32.end [16/16] 0.0, 128
    %v120 = vpop.trf.xlu0
    %v121 = vpop.trf.xlu0
    %v122 = vpop.trf.xlu0
    %v123 = vpop.trf.xlu0
    %v124 = vpop.trf.xlu0
    %v125 = vpop.trf.xlu0
    %v126 = vpop.trf.xlu0
    %v127 = vpop.trf.xlu0
    %v128 = vpop.trf.xlu0
    %v129 = vpop.trf.xlu0
    %v130 = vpop.trf.xlu0
    %v131 = vpop.trf.xlu0
    %v132 = vpop.trf.xlu0
    %v133 = vpop.trf.xlu0
    %v134 = vpop.trf.xlu0
    %v135 = vpop.trf.xlu0
    %136 = vxpose.xlu0.b32.start [1/16] %v30, 128
    %137 = vxpose.xlu0.b32.cont [2/16] %v31, 128
    %138 = vxpose.xlu0.b32.cont [3/16] 0.0, 128
    %139 = vxpose.xlu0.b32.cont [4/16] 0.0, 128
    %140 = vxpose.xlu0.b32.cont [5/16] 0.0, 128
    %141 = vxpose.xlu0.b32.cont [6/16] 0.0, 128
    %142 = vxpose.xlu0.b32.cont [7/16] 0.0, 128
    %143 = vxpose.xlu0.b32.cont [8/16] 0.0, 128
    %144 = vxpose.xlu0.b32.cont [9/16] 0.0, 128
    %145 = vxpose.xlu0.b32.cont [10/16] 0.0, 128
    %146 = vxpose.xlu0.b32.cont [11/16] 0.0, 128
    %147 = vxpose.xlu0.b32.cont [12/16] 0.0, 128
    %148 = vxpose.xlu0.b32.cont [13/16] 0.0, 128
    %149 = vxpose.xlu0.b32.cont [14/16] 0.0, 128
    %150 = vxpose.xlu0.b32.cont [15/16] 0.0, 128
    %151 = vxpose.xlu0.b32.end [16/16] 0.0, 128
    %v152 = vpop.trf.xlu0
    %v153 = vpop.trf.xlu0
    %v154 = vpop.trf.xlu0
    %v155 = vpop.trf.xlu0
    %v156 = vpop.trf.xlu0
    %v157 = vpop.trf.xlu0
    %v158 = vpop.trf.xlu0
    %v159 = vpop.trf.xlu0
    %v160 = vpop.trf.xlu0
    %v161 = vpop.trf.xlu0
    %v162 = vpop.trf.xlu0
    %v163 = vpop.trf.xlu0
    %v164 = vpop.trf.xlu0
    %v165 = vpop.trf.xlu0
    %v166 = vpop.trf.xlu0
    %v167 = vpop.trf.xlu0
    %168 = vxpose.xlu0.b32.start [1/16] %v32, 128
    %169 = vxpose.xlu0.b32.cont [2/16] %v33, 128
    %170 = vxpose.xlu0.b32.cont [3/16] 0.0, 128
    %171 = vxpose.xlu0.b32.cont [4/16] 0.0, 128
    %172 = vxpose.xlu0.b32.cont [5/16] 0.0, 128
    %173 = vxpose.xlu0.b32.cont [6/16] 0.0, 128
    %174 = vxpose.xlu0.b32.cont [7/16] 0.0, 128
    %175 = vxpose.xlu0.b32.cont [8/16] 0.0, 128
    %176 = vxpose.xlu0.b32.cont [9/16] 0.0, 128
    %177 = vxpose.xlu0.b32.cont [10/16] 0.0, 128
    %178 = vxpose.xlu0.b32.cont [11/16] 0.0, 128
    %179 = vxpose.xlu0.b32.cont [12/16] 0.0, 128
    %180 = vxpose.xlu0.b32.cont [13/16] 0.0, 128
    %181 = vxpose.xlu0.b32.cont [14/16] 0.0, 128
    %182 = vxpose.xlu0.b32.cont [15/16] 0.0, 128
    %183 = vxpose.xlu0.b32.end [16/16] 0.0, 128
    %v184 = vpop.trf.xlu0
    %v185 = vpop.trf.xlu0
    %v186 = vpop.trf.xlu0
    %v187 = vpop.trf.xlu0
    %v188 = vpop.trf.xlu0
    %v189 = vpop.trf.xlu0
    %v190 = vpop.trf.xlu0
    %v191 = vpop.trf.xlu0
    %v192 = vpop.trf.xlu0
    %v193 = vpop.trf.xlu0
    %v194 = vpop.trf.xlu0
    %v195 = vpop.trf.xlu0
    %v196 = vpop.trf.xlu0
    %v197 = vpop.trf.xlu0
    %v198 = vpop.trf.xlu0
    %v199 = vpop.trf.xlu0
    %200 = vxpose.xlu0.b32.start [1/16] %v34, 128
    %201 = vxpose.xlu0.b32.cont [2/16] %v35, 128
    %202 = vxpose.xlu0.b32.cont [3/16] 0.0, 128
    %203 = vxpose.xlu0.b32.cont [4/16] 0.0, 128
    %204 = vxpose.xlu0.b32.cont [5/16] 0.0, 128
    %205 = vxpose.xlu0.b32.cont [6/16] 0.0, 128
    %206 = vxpose.xlu0.b32.cont [7/16] 0.0, 128
    %207 = vxpose.xlu0.b32.cont [8/16] 0.0, 128
    %208 = vxpose.xlu0.b32.cont [9/16] 0.0, 128
    %209 = vxpose.xlu0.b32.cont [10/16] 0.0, 128
    %210 = vxpose.xlu0.b32.cont [11/16] 0.0, 128
    %211 = vxpose.xlu0.b32.cont [12/16] 0.0, 128
    %212 = vxpose.xlu0.b32.cont [13/16] 0.0, 128
    %213 = vxpose.xlu0.b32.cont [14/16] 0.0, 128
    %214 = vxpose.xlu0.b32.cont [15/16] 0.0, 128
    %215 = vxpose.xlu0.b32.end [16/16] 0.0, 128
    %v216 = vpop.trf.xlu0
    %v217 = vpop.trf.xlu0
    %v218 = vpop.trf.xlu0
    %v219 = vpop.trf.xlu0
    %v220 = vpop.trf.xlu0
    %v221 = vpop.trf.xlu0
    %v222 = vpop.trf.xlu0
    %v223 = vpop.trf.xlu0
    %v224 = vpop.trf.xlu0
    %v225 = vpop.trf.xlu0
    %v226 = vpop.trf.xlu0
    %v227 = vpop.trf.xlu0
    %v228 = vpop.trf.xlu0
    %v229 = vpop.trf.xlu0
    %v230 = vpop.trf.xlu0
    %v231 = vpop.trf.xlu0
    %232 = vxpose.xlu0.b32.start [1/16] %v36, 128
    %233 = vxpose.xlu0.b32.cont [2/16] %v37, 128
    %234 = vxpose.xlu0.b32.cont [3/16] 0.0, 128
    %235 = vxpose.xlu0.b32.cont [4/16] 0.0, 128
    %236 = vxpose.xlu0.b32.cont [5/16] 0.0, 128
    %237 = vxpose.xlu0.b32.cont [6/16] 0.0, 128
    %238 = vxpose.xlu0.b32.cont [7/16] 0.0, 128
    %239 = vxpose.xlu0.b32.cont [8/16] 0.0, 128
    %240 = vxpose.xlu0.b32.cont [9/16] 0.0, 128
    %241 = vxpose.xlu0.b32.cont [10/16] 0.0, 128
    %242 = vxpose.xlu0.b32.cont [11/16] 0.0, 128
    %243 = vxpose.xlu0.b32.cont [12/16] 0.0, 128
    %244 = vxpose.xlu0.b32.cont [13/16] 0.0, 128
    %245 = vxpose.xlu0.b32.cont [14/16] 0.0, 128
    %246 = vxpose.xlu0.b32.cont [15/16] 0.0, 128
    %247 = vxpose.xlu0.b32.end [16/16] 0.0, 128
    %v248 = vpop.trf.xlu0
    %v249 = vpop.trf.xlu0
    %v250 = vpop.trf.xlu0
    %v251 = vpop.trf.xlu0
    %v252 = vpop.trf.xlu0
    %v253 = vpop.trf.xlu0
    %v254 = vpop.trf.xlu0
    %v255 = vpop.trf.xlu0
    %v256 = vpop.trf.xlu0
    %v257 = vpop.trf.xlu0
    %v258 = vpop.trf.xlu0
    %v259 = vpop.trf.xlu0
    %v260 = vpop.trf.xlu0
    %v261 = vpop.trf.xlu0
    %v262 = vpop.trf.xlu0
    %v263 = vpop.trf.xlu0
    %264 = vxpose.xlu0.b32.start [1/16] %v38, 128
    %265 = vxpose.xlu0.b32.cont [2/16] %v39, 128
    %266 = vxpose.xlu0.b32.cont [3/16] 0.0, 128
    %267 = vxpose.xlu0.b32.cont [4/16] 0.0, 128
    %268 = vxpose.xlu0.b32.cont [5/16] 0.0, 128
    %269 = vxpose.xlu0.b32.cont [6/16] 0.0, 128
    %270 = vxpose.xlu0.b32.cont [7/16] 0.0, 128
    %271 = vxpose.xlu0.b32.cont [8/16] 0.0, 128
    %272 = vxpose.xlu0.b32.cont [9/16] 0.0, 128
    %273 = vxpose.xlu0.b32.cont [10/16] 0.0, 128
    %274 = vxpose.xlu0.b32.cont [11/16] 0.0, 128
    %275 = vxpose.xlu0.b32.cont [12/16] 0.0, 128
    %276 = vxpose.xlu0.b32.cont [13/16] 0.0, 128
    %277 = vxpose.xlu0.b32.cont [14/16] 0.0, 128
    %278 = vxpose.xlu0.b32.cont [15/16] 0.0, 128
    %279 = vxpose.xlu0.b32.end [16/16] 0.0, 128
    %v280 = vpop.trf.xlu0
    %v281 = vpop.trf.xlu0
    %v282 = vpop.trf.xlu0
    %v283 = vpop.trf.xlu0
    %v284 = vpop.trf.xlu0
    %v285 = vpop.trf.xlu0
    %v286 = vpop.trf.xlu0
    %v287 = vpop.trf.xlu0
    %v288 = vpop.trf.xlu0
    %v289 = vpop.trf.xlu0
    %v290 = vpop.trf.xlu0
    %v291 = vpop.trf.xlu0
    %v292 = vpop.trf.xlu0
    %v293 = vpop.trf.xlu0
    %v294 = vpop.trf.xlu0
    %v295 = vpop.trf.xlu0
    %vm296 = vcmask 130048
    %297 = vst.msk [vmem:[%s1] sm:$0xff] %vm296, %v56
    %298 = vst.msk [vmem:[%s1 + $0x8] sm:$0xff] %vm296, %v57
    %299 = vst.msk [vmem:[%s1 + $0x10] sm:$0xff] %vm296, %v58
    %300 = vst.msk [vmem:[%s1 + $0x18] sm:$0xff] %vm296, %v59
    %301 = vst.msk [vmem:[%s1 + $0x20] sm:$0xff] %vm296, %v88
    %302 = vst.msk [vmem:[%s1 + $0x28] sm:$0xff] %vm296, %v89
    %303 = vst.msk [vmem:[%s1 + $0x30] sm:$0xff] %vm296, %v90
    %304 = vst.msk [vmem:[%s1 + $0x38] sm:$0xff] %vm296, %v91
    %305 = vst.msk [vmem:[%s1 + $0x40] sm:$0xff] %vm296, %v120
    %306 = vst.msk [vmem:[%s1 + $0x48] sm:$0xff] %vm296, %v121
    %307 = vst.msk [vmem:[%s1 + $0x50] sm:$0xff] %vm296, %v122
    %308 = vst.msk [vmem:[%s1 + $0x58] sm:$0xff] %vm296, %v123
    %309 = vst.msk [vmem:[%s1 + $0x60] sm:$0xff] %vm296, %v152
    %310 = vst.msk [vmem:[%s1 + $0x68] sm:$0xff] %vm296, %v153
    %311 = vst.msk [vmem:[%s1 + $0x70] sm:$0xff] %vm296, %v154
    %312 = vst.msk [vmem:[%s1 + $0x78] sm:$0xff] %vm296, %v155
    %313 = vst.msk [vmem:[%s1 + $0x80] sm:$0xff] %vm296, %v184
    %314 = vst.msk [vmem:[%s1 + $0x88] sm:$0xff] %vm296, %v185
    %315 = vst.msk [vmem:[%s1 + $0x90] sm:$0xff] %vm296, %v186
    %316 = vst.msk [vmem:[%s1 + $0x98] sm:$0xff] %vm296, %v187
    %317 = vst.msk [vmem:[%s1 + $0xa0] sm:$0xff] %vm296, %v216
    %318 = vst.msk [vmem:[%s1 + $0xa8] sm:$0xff] %vm296, %v217
    %319 = vst.msk [vmem:[%s1 + $0xb0] sm:$0xff] %vm296, %v218
    %320 = vst.msk [vmem:[%s1 + $0xb8] sm:$0xff] %vm296, %v219
    %321 = vst.msk [vmem:[%s1 + $0xc0] sm:$0xff] %vm296, %v248
    %322 = vst.msk [vmem:[%s1 + $0xc8] sm:$0xff] %vm296, %v249
    %323 = vst.msk [vmem:[%s1 + $0xd0] sm:$0xff] %vm296, %v250
    %324 = vst.msk [vmem:[%s1 + $0xd8] sm:$0xff] %vm296, %v251
    %325 = vst.msk [vmem:[%s1 + $0xe0] sm:$0xff] %vm296, %v280
    %326 = vst.msk [vmem:[%s1 + $0xe8] sm:$0xff] %vm296, %v281
    %327 = vst.msk [vmem:[%s1 + $0xf0] sm:$0xff] %vm296, %v282
    %328 = vst.msk [vmem:[%s1 + $0xf8] sm:$0xff] %vm296, %v283
    // Predicated region
    $region10: #{tpu_custom_call.1} parent=1 // pred_check
      _
    $region11: #{tpu_custom_call.1} parent=1 // pred_check_branch
      %330 = sbr.rel (0) target = $region13
    $region12: #{tpu_custom_call.1} parent=1 // pred_region
      _
    $region13: #{tpu_custom_call.1} parent=1 // pred_fallthru
      _
    // Predicated region
    $region14: #{tpu_custom_call.1} parent=1 // pred_check
      _
    $region15: #{tpu_custom_call.1} parent=1 // pred_check_branch
      %332 = sbr.rel (0) target = $region17
    $region16: #{tpu_custom_call.1} parent=1 // pred_region
      _
    $region17: #{tpu_custom_call.1} parent=1 // pred_fallthru
      _
    %333 = vsyncpa [#allocation3], 1

</llo_original>
